<compile_context>
chip_gen: v6e
topology: v6e:2x2x1
jax: 0.10.0
libtpu: 0.0.40
codegen_flags: <defaults>
</compile_context>

<pallas_src>
import functools

import jax
import jax.numpy as jnp
from jax.experimental import pallas as pl
from jax.experimental.pallas import tpu as pltpu

_LANE = 128


def _round_up(v, m):
    return ((v + m - 1) // m) * m


def _round_down(v, m):
    return (v // m) * m


def _scale_value(x, scale_ref):
    """Multiply a tile by the scalar parameter (f32 in SMEM)."""
    s = scale_ref[0]
    if jnp.issubdtype(x.dtype, jnp.floating) and jnp.dtype(x.dtype).itemsize == 2:
        # bf16 / f16: multiply in the activation dtype (halves vreg + VALU work
        # on v6e/v7x, which have bf16 VALUs).  Mosaic widens on v5e as needed.
        s = s.astype(x.dtype)
    return x * s


def _scale_kernel(scale_ref, x_ref, o_ref):
    o_ref[...] = _scale_value(x_ref[...], scale_ref).astype(o_ref.dtype)


def _scale_tail_kernel(tail_block, tail_row, scale_ref, x_ref, tail_ref, o_ref):
    # Bulk rows for this block.  Padded / clamped reads beyond the bulk region
    # produce garbage rows, but those land either on the tail row (overwritten
    # below, before the output DMA) or past the logical output rows (masked).
    o_ref[...] = _scale_value(x_ref[...], scale_ref).astype(o_ref.dtype)

    @pl.when(pl.program_id(0) == tail_block)
    def _():
        t = _scale_value(tail_ref[0:1, :], scale_ref).astype(o_ref.dtype)
        o_ref[pl.ds(tail_row, 1), :] = t


def _pick_tile_rows(n_rows, itemsize, *, force_multiple):
    """Choose the sublane tile size for a (n_rows, 128) slab.

    Targets >= 8 roughly-equal grid steps (>= 4 per TC on v7x) with ~4 MiB
    tiles; falls back to fewer steps only when tiles would drop below
    ~256 KiB.  `force_multiple=True` guarantees a multiple of the dtype-aware
    sublane alignment (needed when input and output row counts differ).
    """
    align = max(8, 32 // max(1, itemsize))          # 8 f32, 16 bf16/f16, 32 int8
    bytes_per_row = _LANE * itemsize
    min_rows = _round_up(max(align, pl.cdiv(256 << 10, bytes_per_row)), align)
    target_rows = _round_up(max(align, (4 << 20) // bytes_per_row), align)
    max_rows = max(align, _round_down((8 << 20) // bytes_per_row, align))

    if n_rows <= min_rows:
        # Tiny input: single (or few) full blocks; step overhead dominates anyway.
        if force_multiple:
            return max(align, _round_down(n_rows, align))
        return n_rows

    steps = max(8, pl.cdiv(n_rows, target_rows))
    tr = _round_up(pl.cdiv(n_rows, steps), align)
    tr = max(min_rows, min(tr, max_rows))
    if force_multiple:
        return min(tr, _round_down(n_rows, align))
    return min(tr, n_rows)


def scale_forward(x, scale_param, *, donate_x=False):
    """Elementwise multiply of x (any shape, e.g. NCHW) by a scalar parameter."""
    orig_shape = x.shape
    orig_dtype = x.dtype
    total = x.size

    # Keep the parameter in f32 (matches the fp32 nn.Parameter).
    scale_arr = jnp.asarray(scale_param, dtype=jnp.float32).reshape((1,))

    if total == 0:
        return x
    if not jnp.issubdtype(orig_dtype, jnp.floating):
        # TODO(synk): non-float inputs fall back to plain JAX (PyTorch-style promotion).
        return x * scale_arr[0]

    itemsize = jnp.dtype(orig_dtype).itemsize
    align = max(8, 32 // max(1, itemsize))
    rem = total % _LANE          # ragged tail (< 128 elements)
    bulk = total - rem           # lane-dense bulk
    n_rows = bulk // _LANE

    if n_rows < align:
        # Too small to be worth a kernel launch (and too small for the ragged
        # splice below): a few hundred elements at most.
        return (x * scale_arr[0]).astype(orig_dtype)

    x_flat = jnp.ravel(x)
    tr = _pick_tile_rows(n_rows, itemsize, force_multiple=(rem != 0))
    tile_bytes = tr * _LANE * itemsize
    # 2 input + 2 output buffers + headroom; >= v5e's 16 MiB scoped default,
    # <= 40 MiB (well under v7x's 64 MiB physical VMEM).
    vmem_limit = int(min(40 << 20, max(16 << 20, 4 * tile_bytes + (2 << 20))))
    cost = pl.CostEstimate(flops=total, transcendentals=0,
                           bytes_accessed=2 * total * itemsize)
    compiler_kwargs = dict(dimension_semantics=("parallel",),
                           vmem_limit_bytes=vmem_limit)

    if rem == 0:
        # Copy-free path: (rows, 128) view of x, output reshaped back.
        x2d = x_flat.reshape(n_rows, _LANE)
        grid = (pl.cdiv(n_rows, tr),)
        call_kwargs = {}
        if donate_x:
            # Caller promises not to reuse x: alias x2d -> output (halves peak
            # HBM footprint for large activations).
            call_kwargs["input_output_aliases"] = {1: 0}
        else:
            compiler_kwargs["allow_input_fusion"] = [False, True]
        out2d = pl.pallas_call(
            _scale_kernel,
            out_shape=jax.ShapeDtypeStruct((n_rows, _LANE), orig_dtype),
            grid=grid,
            in_specs=[
                pl.BlockSpec(memory_space=pltpu.MemorySpace.SMEM),   # scale scalar
                pl.BlockSpec((tr, _LANE), lambda i: (i, 0)),          # input tile
            ],
            out_specs=pl.BlockSpec((tr, _LANE), lambda i: (i, 0)),
            compiler_params=pltpu.CompilerParams(**compiler_kwargs),
            cost_estimate=cost,
            **call_kwargs,
        )(scale_arr, x2d)
        return out2d.reshape(orig_shape)

    # ---- Ragged path: tail handled inside the same pallas_call ----
    # Bulk slice is allowed to fuse into the kernel input (no materialized
    # copy); the tail (< 128 elems) is pre-padded into a tiny (8, 128) block.
    x2d = x_flat[:bulk].reshape(n_rows, _LANE)
    tail2d = jnp.zeros((8, _LANE), orig_dtype).at[0, :rem].set(x_flat[bulk:])

    n_rows_out = n_rows + 1                       # one extra row for the tail
    grid = (pl.cdiv(n_rows_out, tr),)
    last_in_blk = pl.cdiv(n_rows, tr) - 1         # clamp bulk reads to valid blocks
    tail_block = n_rows // tr                     # grid step holding the tail row
    tail_row = n_rows % tr                        # row within that block

    compiler_kwargs["allow_input_fusion"] = [False, True, False]
    kernel = functools.partial(_scale_tail_kernel, tail_block, tail_row)
    out2d = pl.pallas_call(
        kernel,
        out_shape=jax.ShapeDtypeStruct((n_rows_out, _LANE), orig_dtype),
        grid=grid,
        in_specs=[
            pl.BlockSpec(memory_space=pltpu.MemorySpace.SMEM),                     # scale
            pl.BlockSpec((tr, _LANE), lambda i: (jnp.minimum(i, last_in_blk), 0)),  # bulk
            pl.BlockSpec((8, _LANE), lambda i: (0, 0)),                             # tail
        ],
        out_specs=pl.BlockSpec((tr, _LANE), lambda i: (i, 0)),
        compiler_params=pltpu.CompilerParams(**compiler_kwargs),
        cost_estimate=cost,
    )(scale_arr, x2d, tail2d)
    return out2d.reshape(-1)[:total].reshape(orig_shape)


if __name__ == "__main__":
    key = jax.random.PRNGKey(0)
    # Scale(init_value=1.0) parameter; use a non-trivial deterministic value.
    scale = jnp.array([2.5], dtype=jnp.float32)

    # Primary case: NCHW feature map as used by the BorderDet heads.
    x = jax.random.normal(key, (2, 4, 16, 16), dtype=jnp.float32)
    out = jax.block_until_ready(scale_forward(x, scale))
    ref = x * scale[0]
    assert out.shape == x.shape and out.dtype == x.dtype
    assert jnp.allclose(out, ref, atol=1e-6, rtol=1e-6)

    k1, k2 = jax.random.split(key)

    # Multi-step (pipelined) lane-dense path.
    x2 = jax.random.normal(k1, (6, 100, 128), dtype=jnp.float32)
    out2 = jax.block_until_ready(scale_forward(x2, scale))
    assert jnp.allclose(out2, x2 * scale[0], atol=1e-6, rtol=1e-6)

    # Ragged path (total % 128 != 0): tail written inside the same pallas_call.
    x3 = jax.random.normal(k2, (5, 7, 41), dtype=jnp.float32)
    out3 = jax.block_until_ready(scale_forward(x3, scale))
    assert out3.shape == x3.shape and out3.dtype == x3.dtype
    assert jnp.allclose(out3, x3 * scale[0], atol=1e-6, rtol=1e-6)

    print("KERNEL_OK")
</pallas_src>

<mosaic_0001>
module attributes {stable_mosaic.version = 11 : i64} {
  func.func @_scale_kernel(%arg0: i32, %arg1: memref<1xf32, #tpu.memory_space<smem>>, %arg2: memref<16x128xf32, #tpu.memory_space<vmem>>, %arg3: memref<16x128xf32, #tpu.memory_space<vmem>>) attributes {dimension_semantics = [#tpu.dimension_semantics<parallel>], iteration_bounds = array<i64: 1>, scalar_prefetch = 0 : i64, scratch_operands = 0 : i64, tpu.core_type = #tpu.core_type<tc>, window_params = [{transform_indices = @transform_0, window_bounds = array<i64: 1>}, {transform_indices = @transform_1, window_bounds = array<i64: 16, 128>}, {transform_indices = @transform_2, window_bounds = array<i64: 16, 128>}]} {
    %c0 = arith.constant 0 : index
    %c0_0 = arith.constant 0 : index
    %0 = vector.load %arg2[%c0, %c0_0] : memref<16x128xf32, #tpu.memory_space<vmem>>, vector<16x128xf32>
    %c0_1 = arith.constant 0 : index
    %1 = memref.load %arg1[%c0_1] : memref<1xf32, #tpu.memory_space<smem>>
    %2 = vector.broadcast %1 : f32 to vector<16x128xf32>
    %3 = arith.mulf %0, %2 : vector<16x128xf32>
    %c0_2 = arith.constant 0 : index
    %c0_3 = arith.constant 0 : index
    %4 = vector.load %arg3[%c0_2, %c0_3] : memref<16x128xf32, #tpu.memory_space<vmem>>, vector<16x128xf32>
    tpu.vector_store %arg3[%c0_2, %c0_3], %3 {strides = array<i32>} : memref<16x128xf32, #tpu.memory_space<vmem>>, vector<16x128xf32>,
    return
  }
  func.func @transform_0(%arg0: i32) -> i32 {
    %c0_i32 = arith.constant 0 : i32
    %c0_i32_0 = arith.constant 0 : i32
    return %c0_i32 : i32
  }
  func.func @transform_1(%arg0: i32) -> (i32, i32) {
    %c0_i32 = arith.constant 0 : i32
    %c0_i32_0 = arith.constant 0 : i32
    return %arg0, %c0_i32 : i32, i32
  }
  func.func @transform_2(%arg0: i32) -> (i32, i32) {
    %c0_i32 = arith.constant 0 : i32
    %c0_i32_0 = arith.constant 0 : i32
    return %arg0, %c0_i32 : i32, i32
  }
}

</mosaic_0001>

<llo_original>
// kernel: tpu_custom_call.1
$region0: #{tpu_custom_call.1}
  #allocation0 [shape = 'u32[]', space=smem, size = 0x4, offset = 0x4, fixed_abs, tag = 'smem constant byte address 0x4 - core index']
  #allocation1 [shape = 'u32[144,128]{1,0:T(1,128)}', space=vmem, size = 0x12000, scoped, tag = 'internal scratch']
  #allocation2 [shape = 'f32[1]{0:T(128)S(6)}', space=smem, size = 0x200, scoped, tag = 'scoped memory for tpu_custom_call.1']
  %s0 = inlined_call_operand.<no memory space> [shape: f32[1], index: 0, kind: input, shape index: {}]
  %s1 = inlined_call_operand.hbm [shape: f32[16,128], index: 1, kind: input, shape index: {}]
  %s2 = inlined_call_operand.hbm [shape: f32[16,128], index: 2, kind: output, shape index: {}]
  %s3 = sld [smem:[#allocation0]]
  $region22: #{tpu_custom_call.1} parent=0
    _
  %s5 = ssub.s32 1, %s3
  %s6 = scalar_select 0, %s5, %s3
  %7 = sst [smem:[#allocation2]] %s0
  $region1: #{tpu_custom_call.1} parent=0
    #allocation3 [shape = 'u8[8192]{0}', space=vmem, size = 0x2000, scoped, tag = 'input window, operand 1, single buffered']
    #allocation4 [shape = 's32[1]{0}', space=sflag, size = 0x4, scoped, tag = 'scoped memory for tpu_custom_call.1']
    #allocation5 [shape = 's32[1]{0}', space=sflag, size = 0x4, scoped, tag = 'scoped memory for tpu_custom_call.1']
    #allocation6 [shape = 'u8[8192]{0}', space=vmem, size = 0x2000, scoped, tag = 'output window, operand 0, single buffered']
    %8 = vsyncpa [#allocation4], 0
    %9 = vsyncpa [#allocation5], 0
    // Predicated region
    $region2: #{tpu_custom_call.1} parent=1 // pred_check
      _
    $region3: #{tpu_custom_call.1} parent=1 // pred_check_branch
      %11 = sbr.rel (0) target = $region5
    $region4: #{tpu_custom_call.1} parent=1 // pred_region
      _
    $region5: #{tpu_custom_call.1} parent=1 // pred_fallthru
      _
    // Predicated region
    $region6: #{tpu_custom_call.1} parent=1 // pred_check
      _
    $region7: #{tpu_custom_call.1} parent=1 // pred_check_branch
      %13 = sbr.rel (0) target = $region9
    $region8: #{tpu_custom_call.1} parent=1 // pred_region
      %s15 = ssub.s32 256, 256
      %16 = vsyncadd [#allocation4], %s15
      %s17 = sshll.u32 [#allocation3], 4
      %s18 = int_to_ptr.vmem [resolvable:$true] %s17
      %23 = dma.hbm_to_vmem [thread:$0]  %s1, 256, %s18, [#allocation4], 128, 128, 8
    $region9: #{tpu_custom_call.1} parent=1 // pred_fallthru
      _
    // Predicated region
    $region10: #{tpu_custom_call.1} parent=1 // pred_check
      _
    $region11: #{tpu_custom_call.1} parent=1 // pred_check_branch
      %25 = sbr.rel (0) target = $region13
    $region12: #{tpu_custom_call.1} parent=1 // pred_region
      %26 = dma.done [#allocation4], 256
    $region13: #{tpu_custom_call.1} parent=1 // pred_fallthru
      _
    %v27 = vld [vmem:[#allocation3] sm:$0xff]
    %v28 = vld [vmem:[#allocation3 + $0x8] sm:$0xff]
    %s29 = sld [smem:[#allocation2]]
    %v30 = vstv %s29
    %v31 = vmul.f32 %v27, %v30
    %v32 = vmul.f32 %v28, %v30
    %33 = vst [vmem:[#allocation6] sm:$0xff] %v31
    %34 = vst [vmem:[#allocation6 + $0x8] sm:$0xff] %v32
    // Predicated region
    $region14: #{tpu_custom_call.1} parent=1 // pred_check
      _
    $region15: #{tpu_custom_call.1} parent=1 // pred_check_branch
      %36 = sbr.rel (0) target = $region17
    $region16: #{tpu_custom_call.1} parent=1 // pred_region
      %s38 = ssub.s32 256, 256
      %39 = vsyncadd [#allocation5], %s38
      %s40 = sshll.u32 [#allocation6], 4
      %s41 = int_to_ptr.vmem [resolvable:$true] %s40
      %46 = dma.vmem_to_hbm [thread:$0]  %s41, 256, %s2, [#allocation5], 128, 128, 8
    $region17: #{tpu_custom_call.1} parent=1 // pred_fallthru
      _
    // Predicated region
    $region18: #{tpu_custom_call.1} parent=1 // pred_check
      _
    $region19: #{tpu_custom_call.1} parent=1 // pred_check_branch
      %48 = sbr.rel (0) target = $region21
    $region20: #{tpu_custom_call.1} parent=1 // pred_region
      %49 = dma.done [#allocation5], 256
    $region21: #{tpu_custom_call.1} parent=1 // pred_fallthru
      _
    %50 = vsyncpa [#allocation4], 1
    %51 = vsyncpa [#allocation5], 1

</llo_original>
